<compile_context>
chip_gen: v7x
topology: tpu7x:2x2x1
jax: 0.10.0
libtpu: 0.0.40
codegen_flags: <defaults>
</compile_context>

<pallas_src>
import jax
import jax.numpy as jnp
from jax import lax
from jax.experimental import pallas as pl
from jax.experimental.pallas import tpu as pltpu

_LANE = 128
_SUBLANE = 8
_TM = 512     # >= W_out reuse threshold for compute-bound operation on v6e/v7x
_TN = 1024
_TK = 2048    # K is only Ep/Hp here -> usually a single K step (no accumulator)


def _round_up(x, m):
    return ((x + m - 1) // m) * m


def _pad_to(x, shape):
    """Zero-pad x up to `shape`; no-op (no copy) when already that shape."""
    if tuple(x.shape) == tuple(shape):
        return x
    return jnp.zeros(shape, x.dtype).at[tuple(slice(0, s) for s in x.shape)].set(x)


# ---------------------------------------------------------------------------
# Grid-tiled matmul + bias:  out = a @ b + bias
#   a:(M,K) bf16, b:(K,N) bf16, bias:(1,N) f32.  Single-K fast path when K fits one tile.
# ---------------------------------------------------------------------------
def _matmul_bias_kernel_1k(a_ref, b_ref, bias_ref, o_ref):
    o_ref[...] = (jnp.dot(a_ref[...], b_ref[...], preferred_element_type=jnp.float32)
                  + bias_ref[...].astype(jnp.float32)).astype(o_ref.dtype)


def _matmul_bias_kernel_nk(a_ref, b_ref, bias_ref, o_ref, acc_ref):
    k = pl.program_id(2)

    @pl.when(k == 0)
    def _():
        acc_ref[...] = jnp.broadcast_to(bias_ref[...].astype(jnp.float32), acc_ref.shape)

    acc_ref[...] += jnp.dot(a_ref[...], b_ref[...], preferred_element_type=jnp.float32)

    @pl.when(k == pl.num_programs(2) - 1)
    def _():
        o_ref[...] = acc_ref[...].astype(o_ref.dtype)


def matmul_bias(a, b, bias, *, out_dtype=jnp.float32, tm=_TM, tn=_TN, tk=_TK):
    M, K = a.shape
    K2, N = b.shape
    assert K == K2
    tm = min(tm, _round_up(M, _SUBLANE))
    tn = min(tn, _round_up(N, _LANE))
    tk = min(tk, _round_up(K, _LANE))
    Mp, Np, Kp = _round_up(M, tm), _round_up(N, tn), _round_up(K, tk)

    a_p = _pad_to(a, (Mp, Kp))
    b_p = _pad_to(b, (Kp, Np))                       # pre-padded weights skip this copy
    bias_p = _pad_to(bias.astype(jnp.float32), (1, Np))

    flops = 2 * Mp * Np * Kp
    bytes_accessed = (Mp * Kp * a_p.dtype.itemsize + Kp * Np * b_p.dtype.itemsize
                      + Mp * Np * jnp.dtype(out_dtype).itemsize)

    if Kp == tk:
        # Single K step: no K grid axis, no accumulator scratch, no init/finalize.
        grid = (Mp // tm, Np // tn)
        kernel = _matmul_bias_kernel_1k
        in_specs = [pl.BlockSpec((tm, tk), lambda i, j: (i, 0)),
                    pl.BlockSpec((tk, tn), lambda i, j: (0, j)),
                    pl.BlockSpec((1, tn), lambda i, j: (0, j))]
        out_specs = pl.BlockSpec((tm, tn), lambda i, j: (i, j))
        scratch = []
        semantics = ("parallel", "parallel")
    else:
        grid = (Mp // tm, Np // tn, Kp // tk)
        kernel = _matmul_bias_kernel_nk
        in_specs = [pl.BlockSpec((tm, tk), lambda i, j, k: (i, k)),
                    pl.BlockSpec((tk, tn), lambda i, j, k: (k, j)),
                    pl.BlockSpec((1, tn), lambda i, j, k: (0, j))]
        out_specs = pl.BlockSpec((tm, tn), lambda i, j, k: (i, j))
        scratch = [pltpu.VMEM((tm, tn), jnp.float32)]
        semantics = ("parallel", "parallel", "arbitrary")

    out = pl.pallas_call(
        kernel,
        out_shape=jax.ShapeDtypeStruct((Mp, Np), out_dtype),
        grid_spec=pltpu.PrefetchScalarGridSpec(
            num_scalar_prefetch=0, grid=grid,
            in_specs=in_specs, out_specs=out_specs, scratch_shapes=scratch),
        compiler_params=pltpu.CompilerParams(
            dimension_semantics=semantics,
            vmem_limit_bytes=40 * 1024 * 1024),      # ~18 MiB used at full tiles; < 64 MiB v7x
        cost_estimate=pl.CostEstimate(flops=flops, transcendentals=0,
                                      bytes_accessed=bytes_accessed),
    )(a_p, b_p, bias_p)
    return out[:M, :N]


# ---------------------------------------------------------------------------
# LSTM recurrence, streamed over time chunks.  Only h @ W_hh + gate nonlinearities
# remain on the serial path; the x-projection (incl. bias) arrives precomputed (bf16).
# ---------------------------------------------------------------------------
def lstm_streamed(gates_x, w_hh, h0, c0, *, seq_len, tc):
    """gates_x: (Tp, Bp, 4*Hp) bf16   precomputed x @ W_ih + b (gate order i,f,g,o)
       w_hh   : (Hp, 4*Hp)     bf16   hidden-to-hidden weight (pre-transposed, gate-padded)
       h0, c0 : (Bp, Hp)       f32
       returns out (Tp, Bp, Hp) bf16, hN (Bp, Hp) f32, cN (Bp, Hp) f32
    """
    Tp, Bp, G = gates_x.shape
    Hp = h0.shape[1]
    assert G == 4 * Hp and Tp % tc == 0
    nchunks = Tp // tc
    mask_tail = (Tp != seq_len)          # static: only true when T is not a multiple of tc

    def kernel(gx_ref, whh_ref, h0_ref, c0_ref, out_ref, hN_ref, cN_ref, h_scr, c_scr):
        chunk = pl.program_id(0)

        @pl.when(chunk == 0)
        def _():
            h_scr[...] = h0_ref[...]
            c_scr[...] = c0_ref[...]

        def step(t, carry):
            h, c = carry
            gates = gx_ref[t].astype(jnp.float32) + jnp.dot(
                h.astype(whh_ref.dtype), whh_ref[...],
                preferred_element_type=jnp.float32)                       # (Bp, 4*Hp)
            i = jax.nn.sigmoid(gates[:, 0 * Hp:1 * Hp])
            f = jax.nn.sigmoid(gates[:, 1 * Hp:2 * Hp])
            g = jnp.tanh(gates[:, 2 * Hp:3 * Hp])
            o = jax.nn.sigmoid(gates[:, 3 * Hp:4 * Hp])
            c_new = f * c + i * g
            h_new = o * jnp.tanh(c_new)
            if mask_tail:
                valid = (chunk * tc + t) < seq_len
                h_new = jnp.where(valid, h_new, h)
                c_new = jnp.where(valid, c_new, c)
            out_ref[t] = h_new.astype(out_ref.dtype)   # lane-aligned unmasked store
            return (h_new, c_new)

        # Bounded unroll: keeps MXU-pop / EUP overlap without blowing the vreg file.
        h, c = lax.fori_loop(0, tc, step, (h_scr[...], c_scr[...]), unroll=4)
        h_scr[...] = h
        c_scr[...] = c

        @pl.when(chunk == pl.num_programs(0) - 1)
        def _():
            hN_ref[...] = h_scr[...]
            cN_ref[...] = c_scr[...]

    flops = 2 * Tp * Bp * Hp * 4 * Hp
    bytes_accessed = (Tp * Bp * 4 * Hp * 2 + Hp * 4 * Hp * 2
                      + Tp * Bp * Hp * 2 + 4 * Bp * Hp * 4)

    return pl.pallas_call(
        kernel,
        out_shape=(jax.ShapeDtypeStruct((Tp, Bp, Hp), jnp.bfloat16),
                   jax.ShapeDtypeStruct((Bp, Hp), jnp.float32),
                   jax.ShapeDtypeStruct((Bp, Hp), jnp.float32)),
        grid_spec=pltpu.PrefetchScalarGridSpec(
            num_scalar_prefetch=0,
            grid=(nchunks,),
            in_specs=[pl.BlockSpec((tc, Bp, 4 * Hp), lambda ci: (ci, 0, 0)),
                      pl.BlockSpec((Hp, 4 * Hp), lambda ci: (0, 0)),
                      pl.BlockSpec((Bp, Hp), lambda ci: (0, 0)),
                      pl.BlockSpec((Bp, Hp), lambda ci: (0, 0))],
            out_specs=(pl.BlockSpec((tc, Bp, Hp), lambda ci: (ci, 0, 0)),
                       pl.BlockSpec((Bp, Hp), lambda ci: (0, 0)),
                       pl.BlockSpec((Bp, Hp), lambda ci: (0, 0))),
            scratch_shapes=[pltpu.VMEM((Bp, Hp), jnp.float32),
                            pltpu.VMEM((Bp, Hp), jnp.float32)]),
        compiler_params=pltpu.CompilerParams(
            dimension_semantics=("arbitrary",),
            vmem_limit_bytes=32 * 1024 * 1024),      # re-derived for v7x's 64 MiB physical
        cost_estimate=pl.CostEstimate(flops=flops, transcendentals=5 * Tp * Bp * Hp,
                                      bytes_accessed=bytes_accessed),
    )(gates_x, w_hh, h0, c0)


# ---------------------------------------------------------------------------
# One-time parameter preparation: pad / regroup / cast weights OFF the per-call path.
# ---------------------------------------------------------------------------
def prepare_params(params):
    E = params["embedding"].shape[1]
    H = params["w_hh"].shape[0]
    V = params["w_out"].shape[1]
    Ep = _round_up(E, _LANE)
    Hp = _round_up(H, _LANE)
    Vp = _round_up(V, _TN) if V >= _TN else _round_up(V, _LANE)

    # Embedding table: bf16, lane-padded, gathered directly in bf16 per call.
    emb_p = (jnp.zeros((params["embedding"].shape[0], Ep), jnp.bfloat16)
             .at[:, :E].set(params["embedding"].astype(jnp.bfloat16)))

    # Regroup LSTM weights so every gate occupies a lane-aligned Hp block
    # (PyTorch gate order i, f, g, o along the 4H axis).  Zero padding keeps the
    # padded hidden columns exactly zero through the recurrence.
    w_ih = params["w_ih"].reshape(E, 4, H)
    w_hh = params["w_hh"].reshape(H, 4, H)
    b = params["b_gates"].reshape(4, H)
    w_ih_p = (jnp.zeros((Ep, 4, Hp), jnp.bfloat16)
              .at[:E, :, :H].set(w_ih.astype(jnp.bfloat16))).reshape(Ep, 4 * Hp)
    w_hh_p = (jnp.zeros((Hp, 4, Hp), jnp.bfloat16)
              .at[:H, :, :H].set(w_hh.astype(jnp.bfloat16))).reshape(Hp, 4 * Hp)
    b_p = (jnp.zeros((4, Hp), jnp.float32).at[:, :H].set(b.astype(jnp.float32))
           ).reshape(1, 4 * Hp)

    w_out_p = (jnp.zeros((Hp, Vp), jnp.bfloat16)
               .at[:H, :V].set(params["w_out"].astype(jnp.bfloat16)))
    b_out_p = (jnp.zeros((1, Vp), jnp.float32)
               .at[:, :V].set(params["b_out"].astype(jnp.float32)))

    return dict(embedding=emb_p, w_ih=w_ih_p, w_hh=w_hh_p, b_gates=b_p,
                w_out=w_out_p, b_out=b_out_p, E=E, H=H, V=V, Ep=Ep, Hp=Hp, Vp=Vp)


# ---------------------------------------------------------------------------
# Wrapper — equivalent of RNNLM.forward(input, hidden0), rnn_type='LSTM', 1 layer, eval.
# ---------------------------------------------------------------------------
def rnnlm_forward(tokens, hidden0, prep, *, tc=16):
    h0, c0 = hidden0
    T, B = tokens.shape
    H, V = prep["H"], prep["V"]
    Ep, Hp = prep["Ep"], prep["Hp"]

    Bp = _round_up(B, _SUBLANE)
    Tc = min(tc, T)
    Tp = _round_up(T, Tc)

    # Embedding lookup: bf16 gather from the pre-cast, pre-padded table (plain-JAX glue).
    emb = jnp.take(prep["embedding"], tokens, axis=0)                     # (T, B, Ep) bf16
    emb_p = jnp.zeros((Tp, Bp, Ep), jnp.bfloat16).at[:T, :B, :].set(emb)

    # (1) Hoisted input projection: one big MXU matmul over all Tp*Bp rows, bias folded,
    #     bf16 output halves the HBM hand-off into the recurrence.
    gates_x = matmul_bias(emb_p.reshape(Tp * Bp, Ep), prep["w_ih"], prep["b_gates"],
                          out_dtype=jnp.bfloat16).reshape(Tp, Bp, 4 * Hp)

    h0_p = jnp.zeros((Bp, Hp), jnp.float32).at[:B, :H].set(h0[0])
    c0_p = jnp.zeros((Bp, Hp), jnp.float32).at[:B, :H].set(c0[0])

    # (2) Serial recurrence, streamed over time chunks; h/c carry in VMEM scratch.
    out, hN, cN = lstm_streamed(gates_x, prep["w_hh"], h0_p, c0_p, seq_len=T, tc=Tc)

    # TODO(synk): nn.Dropout(p=0.5) is identity in eval mode; training-mode mask not applied.
    dropped = out                                                          # (Tp, Bp, Hp) bf16

    # (3) Vocab projection on the REAL rows only (drop time/batch padding first).
    a = dropped[:T, :B, :].reshape(T * B, Hp)
    logits_flat = matmul_bias(a, prep["w_out"], prep["b_out"], out_dtype=jnp.float32)
    logits = logits_flat[:, :V].reshape(T, B, V)

    return logits, (hN[:B, :H][None], cN[:B, :H][None])


# ---------------------------------------------------------------------------
# Deterministic parameter init (shapes from RNNLM.__init__) + pure-JAX f32 reference
# ---------------------------------------------------------------------------
def init_params(key, vocab_size, embedding_dim, hidden_dim):
    ks = jax.random.split(key, 6)
    scale = 1.0 / jnp.sqrt(hidden_dim)
    return {
        "embedding": jax.random.normal(ks[0], (vocab_size, embedding_dim), jnp.float32),
        "w_ih": jax.random.uniform(ks[1], (embedding_dim, 4 * hidden_dim), jnp.float32,
                                   -scale, scale),
        "w_hh": jax.random.uniform(ks[2], (hidden_dim, 4 * hidden_dim), jnp.float32,
                                   -scale, scale),
        "b_gates": jax.random.uniform(ks[3], (1, 4 * hidden_dim), jnp.float32,
                                      -scale, scale),
        "w_out": jax.random.uniform(ks[4], (hidden_dim, vocab_size), jnp.float32,
                                    -scale, scale),
        "b_out": jax.random.uniform(ks[5], (1, vocab_size), jnp.float32,
                                    -scale, scale),
    }


def rnnlm_reference(tokens, hidden0, params):
    """Pure-JAX f32 reference of RNNLM.forward (eval mode)."""
    h, c = hidden0[0][0], hidden0[1][0]
    H = h.shape[-1]
    emb = jnp.take(params["embedding"], tokens, axis=0)        # (T, B, E)

    def step(carry, x):
        h, c = carry
        gates = x @ params["w_ih"] + h @ params["w_hh"] + params["b_gates"][0]
        i = jax.nn.sigmoid(gates[:, 0 * H:1 * H])
        f = jax.nn.sigmoid(gates[:, 1 * H:2 * H])
        g = jnp.tanh(gates[:, 2 * H:3 * H])
        o = jax.nn.sigmoid(gates[:, 3 * H:4 * H])
        c = f * c + i * g
        h = o * jnp.tanh(c)
        return (h, c), h

    (hN, cN), hs = lax.scan(step, (h, c), emb)
    logits = hs @ params["w_out"] + params["b_out"][0]
    return logits, (hN[None], cN[None])


if __name__ == "__main__":
    # Small shapes consistent with the module: seq=8, batch=2, emb=32, hidden=32, vocab=64.
    T, B, E, H, V = 8, 2, 32, 32, 64

    key = jax.random.PRNGKey(0)
    k_par, k_tok, k_h, k_c = jax.random.split(key, 4)

    params = init_params(k_par, V, E, H)
    prep = prepare_params(params)          # one-time pad/cast, hoisted off the forward path
    tokens = jax.random.randint(k_tok, (T, B), 0, V, dtype=jnp.int32)
    h0 = jax.random.normal(k_h, (1, B, H), jnp.float32)
    c0 = jax.random.normal(k_c, (1, B, H), jnp.float32)

    logits, (hN, cN) = rnnlm_forward(tokens, (h0, c0), prep)
    jax.block_until_ready((logits, hN, cN))

    assert logits.shape == (T, B, V)
    assert hN.shape == (1, B, H) and cN.shape == (1, B, H)
    assert bool(jnp.all(jnp.isfinite(logits)))

    # Loose-tolerance check vs f32 reference (kernel uses bf16 MXU operands).
    ref_logits, (ref_hN, ref_cN) = rnnlm_reference(tokens, (h0, c0), params)
    assert float(jnp.max(jnp.abs(logits - ref_logits))) < 0.3
    assert float(jnp.max(jnp.abs(hN - ref_hN))) < 0.15
    assert float(jnp.max(jnp.abs(cN - ref_cN))) < 0.15

    print("KERNEL_OK")
</pallas_src>

<mosaic_0001>
module attributes {stable_mosaic.version = 11 : i64} {
  func.func @_matmul_bias_kernel_1k(%arg0: i32, %arg1: i32, %arg2: memref<64x128xbf16, #tpu.memory_space<vmem>>, %arg3: memref<128x512xbf16, #tpu.memory_space<vmem>>, %arg4: memref<1x512xf32, #tpu.memory_space<vmem>>, %arg5: memref<64x512xbf16, #tpu.memory_space<vmem>>) attributes {dimension_semantics = [#tpu.dimension_semantics<parallel>, #tpu.dimension_semantics<parallel>], iteration_bounds = array<i64: 1, 1>, scalar_prefetch = 0 : i64, scratch_operands = 0 : i64, tpu.core_type = #tpu.core_type<tc>, window_params = [{transform_indices = @transform_0, window_bounds = array<i64: 64, 128>}, {transform_indices = @transform_1, window_bounds = array<i64: 128, 512>}, {transform_indices = @transform_2, window_bounds = array<i64: 1, 512>}, {transform_indices = @transform_3, window_bounds = array<i64: 64, 512>}]} {
    %c0 = arith.constant 0 : index
    %c0_0 = arith.constant 0 : index
    %0 = vector.load %arg2[%c0, %c0_0] : memref<64x128xbf16, #tpu.memory_space<vmem>>, vector<64x128xbf16>
    %c0_1 = arith.constant 0 : index
    %c0_2 = arith.constant 0 : index
    %1 = vector.load %arg3[%c0_1, %c0_2] : memref<128x512xbf16, #tpu.memory_space<vmem>>, vector<128x512xbf16>
    %cst = arith.constant dense<0.000000e+00> : vector<64x512xf32>
    %2 = tpu.matmul %0, %1, %cst {dimension_numbers = #tpu.dot_dimension_numbers<[1], [0], [0], [1], [0, 0, 1, 1], [], []>} : vector<64x128xbf16>, vector<128x512xbf16>, vector<64x512xf32> -> vector<64x512xf32>
    %c0_3 = arith.constant 0 : index
    %c0_4 = arith.constant 0 : index
    %3 = vector.load %arg4[%c0_3, %c0_4] : memref<1x512xf32, #tpu.memory_space<vmem>>, vector<1x512xf32>
    %4 = vector.broadcast %3 : vector<1x512xf32> to vector<64x512xf32>
    %5 = arith.addf %2, %4 : vector<64x512xf32>
    %6 = arith.truncf %5 : vector<64x512xf32> to vector<64x512xbf16>
    %c0_5 = arith.constant 0 : index
    %c0_6 = arith.constant 0 : index
    %7 = vector.load %arg5[%c0_5, %c0_6] : memref<64x512xbf16, #tpu.memory_space<vmem>>, vector<64x512xbf16>
    tpu.vector_store %arg5[%c0_5, %c0_6], %6 {strides = array<i32>} : memref<64x512xbf16, #tpu.memory_space<vmem>>, vector<64x512xbf16>,
    return
  }
  func.func @transform_0(%arg0: i32, %arg1: i32) -> (i32, i32) {
    %c0_i32 = arith.constant 0 : i32
    %c0_i32_0 = arith.constant 0 : i32
    return %arg0, %c0_i32 : i32, i32
  }
  func.func @transform_1(%arg0: i32, %arg1: i32) -> (i32, i32) {
    %c0_i32 = arith.constant 0 : i32
    %c0_i32_0 = arith.constant 0 : i32
    return %c0_i32, %arg1 : i32, i32
  }
  func.func @transform_2(%arg0: i32, %arg1: i32) -> (i32, i32) {
    %c0_i32 = arith.constant 0 : i32
    %c0_i32_0 = arith.constant 0 : i32
    return %c0_i32, %arg1 : i32, i32
  }
  func.func @transform_3(%arg0: i32, %arg1: i32) -> (i32, i32) {
    %c0_i32 = arith.constant 0 : i32
    return %arg0, %arg1 : i32, i32
  }
}

</mosaic_0001>

<llo_original>
// kernel: tpu_custom_call.1
$region0: #{tpu_custom_call.1}
  #allocation0 [shape = 'u32[]', space=smem, size = 0x4, offset = 0x4, fixed_abs, tag = 'smem constant byte address 0x4 - core index']
  #allocation1 [shape = 'u32[144,128]{1,0:T(1,128)}', space=vmem, size = 0x12000, scoped, tag = 'internal scratch']
  %s0 = inlined_call_operand.hbm [shape: bf16[64,128], index: 0, kind: input, shape index: {}]
  %s1 = inlined_call_operand.hbm [shape: bf16[128,512], index: 1, kind: input, shape index: {}]
  %s2 = inlined_call_operand.vmem [shape: f32[1,512], index: 2, kind: input, shape index: {}]
  %s3 = inlined_call_operand.hbm [shape: bf16[64,512], index: 3, kind: output, shape index: {}]
  %s4 = sld [smem:[#allocation0]]
  $region30: #{tpu_custom_call.1} parent=0
    _
  %s6 = ssub.s32 1, %s4
  %s7 = scalar_select 0, %s6, %s4
  $region1: #{tpu_custom_call.1} parent=0
    #allocation2 [shape = 'u8[16384]{0}', space=vmem, size = 0x4000, scoped, tag = 'input window, operand 0, single buffered']
    #allocation3 [shape = 's32[1]{0}', space=sflag, size = 0x4, scoped, tag = 'scoped memory for tpu_custom_call.1']
    #allocation4 [shape = 's32[1]{0}', space=sflag, size = 0x4, scoped, tag = 'scoped memory for tpu_custom_call.1']
    #allocation5 [shape = 'u8[131072]{0}', space=vmem, size = 0x20000, scoped, tag = 'input window, operand 1, single buffered']
    #allocation6 [shape = 's32[1]{0}', space=sflag, size = 0x4, scoped, tag = 'scoped memory for tpu_custom_call.1']
    #allocation7 [shape = 'u8[65536]{0}', space=vmem, size = 0x10000, scoped, tag = 'output window, operand 0, single buffered']
    %8 = vsyncpa [#allocation3], 0
    %9 = vsyncpa [#allocation6], 0
    %10 = vsyncpa [#allocation4], 0
    // Predicated region
    $region2: #{tpu_custom_call.1} parent=1 // pred_check
      _
    $region3: #{tpu_custom_call.1} parent=1 // pred_check_branch
      %12 = sbr.rel (0) target = $region5
    $region4: #{tpu_custom_call.1} parent=1 // pred_region
      %s14 = ssub.s32 512, 512
      %15 = vsyncadd [#allocation3], %s14
      %s16 = sshll.u32 [#allocation2], 4
      %s17 = int_to_ptr.vmem [resolvable:$true] %s16
      %22 = dma.hbm_to_vmem [thread:$0]  %s0, 512, %s17, [#allocation3], 64, 64, 4
    $region5: #{tpu_custom_call.1} parent=1 // pred_fallthru
      _
    // Predicated region
    $region6: #{tpu_custom_call.1} parent=1 // pred_check
      _
    $region7: #{tpu_custom_call.1} parent=1 // pred_check_branch
      %24 = sbr.rel (0) target = $region9
    $region8: #{tpu_custom_call.1} parent=1 // pred_region
      %s26 = ssub.s32 4096, 4096
      %27 = vsyncadd [#allocation6], %s26
      %s28 = sshll.u32 [#allocation5], 4
      %s29 = int_to_ptr.vmem [resolvable:$true] %s28
      %34 = dma.hbm_to_vmem [thread:$0]  %s1, 4096, %s29, [#allocation6], 256, 256, 16
    $region9: #{tpu_custom_call.1} parent=1 // pred_fallthru
      _
    // Predicated region
    $region10: #{tpu_custom_call.1} parent=1 // pred_check
      _
    $region11: #{tpu_custom_call.1} parent=1 // pred_check_branch
      %36 = sbr.rel (0) target = $region13
    $region12: #{tpu_custom_call.1} parent=1 // pred_region
      _
    $region13: #{tpu_custom_call.1} parent=1 // pred_fallthru
      _
    // Predicated region
    $region14: #{tpu_custom_call.1} parent=1 // pred_check
      _
    $region15: #{tpu_custom_call.1} parent=1 // pred_check_branch
      %38 = sbr.rel (0) target = $region17
    $region16: #{tpu_custom_call.1} parent=1 // pred_region
      %39 = dma.done [#allocation3], 512
    $region17: #{tpu_custom_call.1} parent=1 // pred_fallthru
      _
    // Predicated region
    $region18: #{tpu_custom_call.1} parent=1 // pred_check
      _
    $region19: #{tpu_custom_call.1} parent=1 // pred_check_branch
      %41 = sbr.rel (0) target = $region21
    $region20: #{tpu_custom_call.1} parent=1 // pred_region
      %42 = dma.done [#allocation6], 4096
    $region21: #{tpu_custom_call.1} parent=1 // pred_fallthru
      _
    %v44 = vld [vmem:[#allocation2] sm:$0xf]
    %v45 = vld [vmem:[#allocation2 + $0x4] sm:$0xf]
    %v46 = vld [vmem:[#allocation2 + $0x8] sm:$0xf]
    %v47 = vld [vmem:[#allocation2 + $0xc] sm:$0xf]
    %v48 = vld [vmem:[#allocation2 + $0x10] sm:$0xf]
    %v49 = vld [vmem:[#allocation2 + $0x14] sm:$0xf]
    %v50 = vld [vmem:[#allocation2 + $0x18] sm:$0xf]
    %v51 = vld [vmem:[#allocation2 + $0x1c] sm:$0xf]
    %v52 = vld [vmem:[#allocation5] sm:$0xff]
    %v53 = vld [vmem:[#allocation5 + $0x8] sm:$0xff]
    %v54 = vld [vmem:[#allocation5 + $0x10] sm:$0xff]
    %v55 = vld [vmem:[#allocation5 + $0x18] sm:$0xff]
    %v56 = vld [vmem:[#allocation5 + $0x20] sm:$0xff]
    %v57 = vld [vmem:[#allocation5 + $0x28] sm:$0xff]
    %v58 = vld [vmem:[#allocation5 + $0x30] sm:$0xff]
    %v59 = vld [vmem:[#allocation5 + $0x38] sm:$0xff]
    %v60 = vld [vmem:[#allocation5 + $0x40] sm:$0xff]
    %v61 = vld [vmem:[#allocation5 + $0x48] sm:$0xff]
    %v62 = vld [vmem:[#allocation5 + $0x50] sm:$0xff]
    %v63 = vld [vmem:[#allocation5 + $0x58] sm:$0xff]
    %v64 = vld [vmem:[#allocation5 + $0x60] sm:$0xff]
    %v65 = vld [vmem:[#allocation5 + $0x68] sm:$0xff]
    %v66 = vld [vmem:[#allocation5 + $0x70] sm:$0xff]
    %v67 = vld [vmem:[#allocation5 + $0x78] sm:$0xff]
    %v68 = vld [vmem:[#allocation5 + $0x80] sm:$0xff]
    %v69 = vld [vmem:[#allocation5 + $0x88] sm:$0xff]
    %v70 = vld [vmem:[#allocation5 + $0x90] sm:$0xff]
    %v71 = vld [vmem:[#allocation5 + $0x98] sm:$0xff]
    %v72 = vld [vmem:[#allocation5 + $0xa0] sm:$0xff]
    %v73 = vld [vmem:[#allocation5 + $0xa8] sm:$0xff]
    %v74 = vld [vmem:[#allocation5 + $0xb0] sm:$0xff]
    %v75 = vld [vmem:[#allocation5 + $0xb8] sm:$0xff]
    %v76 = vld [vmem:[#allocation5 + $0xc0] sm:$0xff]
    %v77 = vld [vmem:[#allocation5 + $0xc8] sm:$0xff]
    %v78 = vld [vmem:[#allocation5 + $0xd0] sm:$0xff]
    %v79 = vld [vmem:[#allocation5 + $0xd8] sm:$0xff]
    %v80 = vld [vmem:[#allocation5 + $0xe0] sm:$0xff]
    %v81 = vld [vmem:[#allocation5 + $0xe8] sm:$0xff]
    %v82 = vld [vmem:[#allocation5 + $0xf0] sm:$0xff]
    %v83 = vld [vmem:[#allocation5 + $0xf8] sm:$0xff]
    %v84 = vld [vmem:[%s2] sm:$0xf]
    %v86 = vlaneseq
    %v87 = vshrl.u32 %v86, 7
    %v88 = vsub.s32 0, %v87
    %v89 = vrot.slane %v84, %v88
    %v90 = vlaneseq
    %v91 = vshrl.u32 %v90, 7
    %v92 = vsub.s32 1, %v91
    %v93 = vrot.slane %v84, %v92
    %v94 = vlaneseq
    %v95 = vshrl.u32 %v94, 7
    %v96 = vsub.s32 2, %v95
    %v97 = vrot.slane %v84, %v96
    %v98 = vlaneseq
    %v99 = vshrl.u32 %v98, 7
    %v100 = vsub.s32 3, %v99
    %v101 = vrot.slane %v84, %v100
    %v114 = vunpack.c.l.b16 %v44
    %v115 = vunpack.c.l.b16 %v45
    %v116 = vunpack.c.l.b16 %v46
    %v117 = vunpack.c.l.b16 %v47
    %v118 = vunpack.c.l.b16 %v48
    %v119 = vunpack.c.l.b16 %v49
    %v120 = vunpack.c.l.b16 %v50
    %v121 = vunpack.c.l.b16 %v51
    %v122 = vpack.c.b16 %v115, %v114
    %v123 = vpack.c.b16 %v117, %v116
    %v124 = vpack.c.b16 %v119, %v118
    %v125 = vpack.c.b16 %v121, %v120
    %v162 = vunpack.c.l.b16 %v52
    %v163 = vunpack.c.h.b16 %v52
    %v164 = vunpack.c.l.b16 %v53
    %v165 = vunpack.c.h.b16 %v53
    %v166 = vunpack.c.l.b16 %v54
    %v167 = vunpack.c.h.b16 %v54
    %v168 = vunpack.c.l.b16 %v55
    %v169 = vunpack.c.h.b16 %v55
    %v170 = vunpack.c.l.b16 %v56
    %v171 = vunpack.c.h.b16 %v56
    %v172 = vunpack.c.l.b16 %v57
    %v173 = vunpack.c.h.b16 %v57
    %v174 = vunpack.c.l.b16 %v58
    %v175 = vunpack.c.h.b16 %v58
    %v176 = vunpack.c.l.b16 %v59
    %v177 = vunpack.c.h.b16 %v59
    %v178 = vunpack.c.l.b16 %v60
    %v179 = vunpack.c.h.b16 %v60
    %v180 = vunpack.c.l.b16 %v61
    %v181 = vunpack.c.h.b16 %v61
    %v182 = vunpack.c.l.b16 %v62
    %v183 = vunpack.c.h.b16 %v62
    %v184 = vunpack.c.l.b16 %v63
    %v185 = vunpack.c.h.b16 %v63
    %v186 = vunpack.c.l.b16 %v64
    %v187 = vunpack.c.h.b16 %v64
    %v188 = vunpack.c.l.b16 %v65
    %v189 = vunpack.c.h.b16 %v65
    %v190 = vunpack.c.l.b16 %v66
    %v191 = vunpack.c.h.b16 %v66
    %v192 = vunpack.c.l.b16 %v67
    %v193 = vunpack.c.h.b16 %v67
    %v194 = vunpack.c.l.b16 %v68
    %v195 = vunpack.c.h.b16 %v68
    %v196 = vunpack.c.l.b16 %v69
    %v197 = vunpack.c.h.b16 %v69
    %v198 = vunpack.c.l.b16 %v70
    %v199 = vunpack.c.h.b16 %v70
    %v200 = vunpack.c.l.b16 %v71
    %v201 = vunpack.c.h.b16 %v71
    %v202 = vunpack.c.l.b16 %v72
    %v203 = vunpack.c.h.b16 %v72
    %v204 = vunpack.c.l.b16 %v73
    %v205 = vunpack.c.h.b16 %v73
    %v206 = vunpack.c.l.b16 %v74
    %v207 = vunpack.c.h.b16 %v74
    %v208 = vunpack.c.l.b16 %v75
    %v209 = vunpack.c.h.b16 %v75
    %v210 = vunpack.c.l.b16 %v76
    %v211 = vunpack.c.h.b16 %v76
    %v212 = vunpack.c.l.b16 %v77
    %v213 = vunpack.c.h.b16 %v77
    %v214 = vunpack.c.l.b16 %v78
    %v215 = vunpack.c.h.b16 %v78
    %v216 = vunpack.c.l.b16 %v79
    %v217 = vunpack.c.h.b16 %v79
    %v218 = vunpack.c.l.b16 %v80
    %v219 = vunpack.c.h.b16 %v80
    %v220 = vunpack.c.l.b16 %v81
    %v221 = vunpack.c.h.b16 %v81
    %v222 = vunpack.c.l.b16 %v82
    %v223 = vunpack.c.h.b16 %v82
    %v224 = vunpack.c.l.b16 %v83
    %v225 = vunpack.c.h.b16 %v83
    %v226 = vpack.c.b16 %v166, %v162
    %v227 = vpack.c.b16 %v167, %v163
    %v228 = vpack.c.b16 %v168, %v164
    %v229 = vpack.c.b16 %v169, %v165
    %v230 = vpack.c.b16 %v174, %v170
    %v231 = vpack.c.b16 %v175, %v171
    %v232 = vpack.c.b16 %v176, %v172
    %v233 = vpack.c.b16 %v177, %v173
    %v234 = vpack.c.b16 %v182, %v178
    %v235 = vpack.c.b16 %v183, %v179
    %v236 = vpack.c.b16 %v184, %v180
    %v237 = vpack.c.b16 %v185, %v181
    %v238 = vpack.c.b16 %v190, %v186
    %v239 = vpack.c.b16 %v191, %v187
    %v240 = vpack.c.b16 %v192, %v188
    %v241 = vpack.c.b16 %v193, %v189
    %v242 = vpack.c.b16 %v198, %v194
    %v243 = vpack.c.b16 %v199, %v195
    %v244 = vpack.c.b16 %v200, %v196
    %v245 = vpack.c.b16 %v201, %v197
    %v246 = vpack.c.b16 %v206, %v202
    %v247 = vpack.c.b16 %v207, %v203
    %v248 = vpack.c.b16 %v208, %v204
    %v249 = vpack.c.b16 %v209, %v205
    %v250 = vpack.c.b16 %v214, %v210
    %v251 = vpack.c.b16 %v215, %v211
    %v252 = vpack.c.b16 %v216, %v212
    %v253 = vpack.c.b16 %v217, %v213
    %v254 = vpack.c.b16 %v222, %v218
    %v255 = vpack.c.b16 %v223, %v219
    %v256 = vpack.c.b16 %v224, %v220
    %v257 = vpack.c.b16 %v225, %v221
    %290 = vmatprep.subr.bf16.mxu0 %v227
    %291 = vmatpush1.bf16.msra.mxu0 %v226
    %292 = vmatprep.subr.bf16.mxu0 %v231
    %293 = vmatpush1.bf16.msra.mxu0 %v230
    %294 = vmatprep.subr.bf16.mxu0 %v235
    %295 = vmatpush1.bf16.msra.mxu0 %v234
    %296 = vmatprep.subr.bf16.mxu0 %v239
    %297 = vmatpush1.bf16.msra.mxu0 %v238
    %298 = vmatprep.subr.bf16.mxu0 %v243
    %299 = vmatpush1.bf16.msra.mxu0 %v242
    %300 = vmatprep.subr.bf16.mxu0 %v247
    %301 = vmatpush1.bf16.msra.mxu0 %v246
    %302 = vmatprep.subr.bf16.mxu0 %v251
    %303 = vmatpush1.bf16.msra.mxu0 %v250
    %304 = vmatprep.subr.bf16.mxu0 %v255
    %305 = vmatpush1.bf16.msra.mxu0 %v254
    %306 = vmatprep.subr.bf16.mxu0 0
    %307 = vmatpush1.bf16.msra.mxu0 0
    %308 = vmatprep.subr.bf16.mxu0 0
    %309 = vmatpush1.bf16.msra.mxu0 0
    %310 = vmatprep.subr.bf16.mxu0 0
    %311 = vmatpush1.bf16.msra.mxu0 0
    %312 = vmatprep.subr.bf16.mxu0 0
    %313 = vmatpush1.bf16.msra.mxu0 0
    %314 = vmatprep.subr.bf16.mxu0 0
    %315 = vmatpush1.bf16.msra.mxu0 0
    %316 = vmatprep.subr.bf16.mxu0 0
    %317 = vmatpush1.bf16.msra.mxu0 0
    %318 = vmatprep.subr.bf16.mxu0 0
    %319 = vmatpush1.bf16.msra.mxu0 0
    %320 = vmatprep.subr.bf16.mxu0 0
    %321 = vmatpush1.bf16.msra.mxu0 0
    %322 = vmatprep.mubr.bf16.mxu0 0
    %323 = vmatmul.mubr.bf16.gmra.mrb[0].mxu0 %v122
    %v324 = vpop.f32.mrb[0].mxu0
    %v325 = vadd.f32 %v89, %v324
    %v326 = vpop.f32.mrb[0].mxu0
    %v327 = vadd.f32 %v93, %v326
    %v328 = vpop.f32.mrb[0].mxu0
    %v329 = vadd.f32 %v89, %v328
    %v330 = vpop.f32.mrb[0].mxu0
    %v331 = vadd.f32 %v93, %v330
    %332 = vmatprep.mubr.bf16.mxu0 0
    %333 = vmatmul.mubr.bf16.gmra.mrb[0].mxu0 %v123
    %v334 = vpop.f32.mrb[0].mxu0
    %v335 = vadd.f32 %v89, %v334
    %v336 = vpop.f32.mrb[0].mxu0
    %v337 = vadd.f32 %v93, %v336
    %v338 = vpop.f32.mrb[0].mxu0
    %v339 = vadd.f32 %v89, %v338
    %v340 = vpop.f32.mrb[0].mxu0
    %v341 = vadd.f32 %v93, %v340
    %342 = vmatprep.mubr.bf16.mxu0 0
    %343 = vmatmul.mubr.bf16.gmra.mrb[0].mxu0 %v124
    %v344 = vpop.f32.mrb[0].mxu0
    %v345 = vadd.f32 %v89, %v344
    %v346 = vpop.f32.mrb[0].mxu0
    %v347 = vadd.f32 %v93, %v346
    %v348 = vpop.f32.mrb[0].mxu0
    %v349 = vadd.f32 %v89, %v348
    %v350 = vpop.f32.mrb[0].mxu0
    %v351 = vadd.f32 %v93, %v350
    %352 = vmatprep.mubr.bf16.mxu0 0
    %353 = vmatmul.mubr.bf16.gmra.mrb[0].mxu0 %v125
    %v354 = vpop.f32.mrb[0].mxu0
    %v355 = vadd.f32 %v89, %v354
    %v356 = vpop.f32.mrb[0].mxu0
    %v357 = vadd.f32 %v93, %v356
    %v358 = vpop.f32.mrb[0].mxu0
    %v359 = vadd.f32 %v89, %v358
    %v360 = vpop.f32.mrb[0].mxu0
    %v361 = vadd.f32 %v93, %v360
    %362 = vdwg.mxu0
    %363 = vmatprep.subr.bf16.mxu0 %v229
    %364 = vmatpush1.bf16.msra.mxu0 %v228
    %365 = vmatprep.subr.bf16.mxu0 %v233
    %366 = vmatpush1.bf16.msra.mxu0 %v232
    %367 = vmatprep.subr.bf16.mxu0 %v237
    %368 = vmatpush1.bf16.msra.mxu0 %v236
    %369 = vmatprep.subr.bf16.mxu0 %v241
    %370 = vmatpush1.bf16.msra.mxu0 %v240
    %371 = vmatprep.subr.bf16.mxu0 %v245
    %372 = vmatpush1.bf16.msra.mxu0 %v244
    %373 = vmatprep.subr.bf16.mxu0 %v249
    %374 = vmatpush1.bf16.msra.mxu0 %v248
    %375 = vmatprep.subr.bf16.mxu0 %v253
    %376 = vmatpush1.bf16.msra.mxu0 %v252
    %377 = vmatprep.subr.bf16.mxu0 %v257
    %378 = vmatpush1.bf16.msra.mxu0 %v256
    %379 = vmatprep.subr.bf16.mxu0 0
    %380 = vmatpush1.bf16.msra.mxu0 0
    %381 = vmatprep.subr.bf16.mxu0 0
    %382 = vmatpush1.bf16.msra.mxu0 0
    %383 = vmatprep.subr.bf16.mxu0 0
    %384 = vmatpush1.bf16.msra.mxu0 0
    %385 = vmatprep.subr.bf16.mxu0 0
    %386 = vmatpush1.bf16.msra.mxu0 0
    %387 = vmatprep.subr.bf16.mxu0 0
    %388 = vmatpush1.bf16.msra.mxu0 0
    %389 = vmatprep.subr.bf16.mxu0 0
    %390 = vmatpush1.bf16.msra.mxu0 0
    %391 = vmatprep.subr.bf16.mxu0 0
    %392 = vmatpush1.bf16.msra.mxu0 0
    %393 = vmatprep.subr.bf16.mxu0 0
    %394 = vmatpush1.bf16.msra.mxu0 0
    %395 = vmatprep.mubr.bf16.mxu0 0
    %396 = vmatmul.mubr.bf16.gmra.mrb[0].mxu0 %v122
    %v397 = vpop.f32.mrb[0].mxu0
    %v398 = vadd.f32 %v97, %v397
    %v399 = vpop.f32.mrb[0].mxu0
    %v400 = vadd.f32 %v101, %v399
    %v401 = vpop.f32.mrb[0].mxu0
    %v402 = vadd.f32 %v97, %v401
    %v403 = vpop.f32.mrb[0].mxu0
    %v404 = vadd.f32 %v101, %v403
    %405 = vmatprep.mubr.bf16.mxu0 0
    %406 = vmatmul.mubr.bf16.gmra.mrb[0].mxu0 %v123
    %v407 = vpop.f32.mrb[0].mxu0
    %v408 = vadd.f32 %v97, %v407
    %v409 = vpop.f32.mrb[0].mxu0
    %v410 = vadd.f32 %v101, %v409
    %v411 = vpop.f32.mrb[0].mxu0
    %v412 = vadd.f32 %v97, %v411
    %v413 = vpop.f32.mrb[0].mxu0
    %v414 = vadd.f32 %v101, %v413
    %415 = vmatprep.mubr.bf16.mxu0 0
    %416 = vmatmul.mubr.bf16.gmra.mrb[0].mxu0 %v124
    %v417 = vpop.f32.mrb[0].mxu0
    %v418 = vadd.f32 %v97, %v417
    %v419 = vpop.f32.mrb[0].mxu0
    %v420 = vadd.f32 %v101, %v419
    %v421 = vpop.f32.mrb[0].mxu0
    %v422 = vadd.f32 %v97, %v421
    %v423 = vpop.f32.mrb[0].mxu0
    %v424 = vadd.f32 %v101, %v423
    %425 = vmatprep.mubr.bf16.mxu0 0
    %426 = vmatmul.mubr.bf16.gmra.mrb[0].mxu0 %v125
    %v427 = vpop.f32.mrb[0].mxu0
    %v428 = vadd.f32 %v97, %v427
    %v429 = vpop.f32.mrb[0].mxu0
    %v430 = vadd.f32 %v101, %v429
    %v431 = vpop.f32.mrb[0].mxu0
    %v432 = vadd.f32 %v97, %v431
    %v433 = vpop.f32.mrb[0].mxu0
    %v434 = vadd.f32 %v101, %v433
    %435 = vdwg.mxu0
    %v436 = vpack.c.bf16 %v329, %v325
    %v437 = vpack.c.bf16 %v331, %v327
    %v438 = vpack.c.bf16 %v402, %v398
    %v439 = vpack.c.bf16 %v404, %v400
    %v440 = vpack.c.bf16 %v339, %v335
    %v441 = vpack.c.bf16 %v341, %v337
    %v442 = vpack.c.bf16 %v412, %v408
    %v443 = vpack.c.bf16 %v414, %v410
    %v444 = vpack.c.bf16 %v349, %v345
    %v445 = vpack.c.bf16 %v351, %v347
    %v446 = vpack.c.bf16 %v422, %v418
    %v447 = vpack.c.bf16 %v424, %v420
    %v448 = vpack.c.bf16 %v359, %v355
    %v449 = vpack.c.bf16 %v361, %v357
    %v450 = vpack.c.bf16 %v432, %v428
    %v451 = vpack.c.bf16 %v434, %v430
    %v468 = vunpack.c.l.b16 %v436
    %v469 = vunpack.c.l.b16 %v437
    %v470 = vunpack.c.l.b16 %v438
    %v471 = vunpack.c.l.b16 %v439
    %v472 = vunpack.c.h.b16 %v436
    %v473 = vunpack.c.h.b16 %v437
    %v474 = vunpack.c.h.b16 %v438
    %v475 = vunpack.c.h.b16 %v439
    %v476 = vunpack.c.l.b16 %v440
    %v477 = vunpack.c.l.b16 %v441
    %v478 = vunpack.c.l.b16 %v442
    %v479 = vunpack.c.l.b16 %v443
    %v480 = vunpack.c.h.b16 %v440
    %v481 = vunpack.c.h.b16 %v441
    %v482 = vunpack.c.h.b16 %v442
    %v483 = vunpack.c.h.b16 %v443
    %v484 = vunpack.c.l.b16 %v444
    %v485 = vunpack.c.l.b16 %v445
    %v486 = vunpack.c.l.b16 %v446
    %v487 = vunpack.c.l.b16 %v447
    %v488 = vunpack.c.h.b16 %v444
    %v489 = vunpack.c.h.b16 %v445
    %v490 = vunpack.c.h.b16 %v446
    %v491 = vunpack.c.h.b16 %v447
    %v492 = vunpack.c.l.b16 %v448
    %v493 = vunpack.c.l.b16 %v449
    %v494 = vunpack.c.l.b16 %v450
    %v495 = vunpack.c.l.b16 %v451
    %v496 = vunpack.c.h.b16 %v448
    %v497 = vunpack.c.h.b16 %v449
    %v498 = vunpack.c.h.b16 %v450
    %v499 = vunpack.c.h.b16 %v451
    %v500 = vpack.c.b16 %v469, %v468
    %v501 = vpack.c.b16 %v471, %v470
    %v502 = vpack.c.b16 %v473, %v472
    %v503 = vpack.c.b16 %v475, %v474
    %v504 = vpack.c.b16 %v477, %v476
    %v505 = vpack.c.b16 %v479, %v478
    %v506 = vpack.c.b16 %v481, %v480
    %v507 = vpack.c.b16 %v483, %v482
    %v508 = vpack.c.b16 %v485, %v484
    %v509 = vpack.c.b16 %v487, %v486
    %v510 = vpack.c.b16 %v489, %v488
    %v511 = vpack.c.b16 %v491, %v490
    %v512 = vpack.c.b16 %v493, %v492
    %v513 = vpack.c.b16 %v495, %v494
    %v514 = vpack.c.b16 %v497, %v496
    %v515 = vpack.c.b16 %v499, %v498
    %532 = vst [vmem:[#allocation7] sm:$0xff] %v500
    %533 = vst [vmem:[#allocation7 + $0x8] sm:$0xff] %v501
    %534 = vst [vmem:[#allocation7 + $0x10] sm:$0xff] %v502
    %535 = vst [vmem:[#allocation7 + $0x18] sm:$0xff] %v503
    %536 = vst [vmem:[#allocation7 + $0x20] sm:$0xff] %v504
    %537 = vst [vmem:[#allocation7 + $0x28] sm:$0xff] %v505
    %538 = vst [vmem:[#allocation7 + $0x30] sm:$0xff] %v506
    %539 = vst [vmem:[#allocation7 + $0x38] sm:$0xff] %v507
    %540 = vst [vmem:[#allocation7 + $0x40] sm:$0xff] %v508
    %541 = vst [vmem:[#allocation7 + $0x48] sm:$0xff] %v509
    %542 = vst [vmem:[#allocation7 + $0x50] sm:$0xff] %v510
    %543 = vst [vmem:[#allocation7 + $0x58] sm:$0xff] %v511
    %544 = vst [vmem:[#allocation7 + $0x60] sm:$0xff] %v512
    %545 = vst [vmem:[#allocation7 + $0x68] sm:$0xff] %v513
    %546 = vst [vmem:[#allocation7 + $0x70] sm:$0xff] %v514
    %547 = vst [vmem:[#allocation7 + $0x78] sm:$0xff] %v515
    // Predicated region
    $region22: #{tpu_custom_call.1} parent=1 // pred_check
      _
    $region23: #{tpu_custom_call.1} parent=1 // pred_check_branch
      %549 = sbr.rel (0) target = $region25
    $region24: #{tpu_custom_call.1} parent=1 // pred_region
      %s551 = ssub.s32 2048, 2048
      %552 = vsyncadd [#allocation4], %s551
      %s553 = sshll.u32 [#allocation7], 4
      %s554 = int_to_ptr.vmem [resolvable:$true] %s553
      %559 = dma.vmem_to_hbm [thread:$0]  %s554, 2048, %s3, [#allocation4], 256, 256, 16
    $region25: #{tpu_custom_call.1} parent=1 // pred_fallthru
      _
    // Predicated region
    $region26: #{tpu_custom_call.1} parent=1 // pred_check
      _
    $region27: #{tpu_custom_call.1} parent=1 // pred_check_branch
      %561 = sbr.rel (0) target = $region29
    $region28: #{tpu_custom_call.1} parent=1 // pred_region
      %562 = dma.done [#allocation4], 2048
    $region29: #{tpu_custom_call.1} parent=1 // pred_fallthru
      _
    %563 = vsyncpa [#allocation3], 1
    %564 = vsyncpa [#allocation6], 1
    %565 = vsyncpa [#allocation4], 1

</llo_original>
